<compile_context>
chip_gen: v7x
topology: tpu7x:2x2x1
jax: 0.10.0
libtpu: 0.0.40
codegen_flags: <defaults>
</compile_context>

<pallas_src>
import functools

import jax
import jax.numpy as jnp
from jax.experimental import pallas as pl
from jax.experimental.pallas import tpu as pltpu

BN_EPS = 1e-5          # torch.nn.BatchNorm2d default eps
NORM_EPS = 1e-12       # torch.nn.functional.normalize default eps

# Set to jnp.bfloat16 for ~2x MXU / HBM throughput on v6e / v7x (keep f32 on v5e, whose
# VPU has no native bf16). Accumulation and BN statistics stay f32 either way.
MXU_INPUT_DTYPE = jnp.float32

# Above the 16/32 MiB default scoped-VMEM limits, below v7x's 64 MiB physical VMEM.
VMEM_LIMIT_BYTES = 48 * 1024 * 1024


# ----------------------------------------------------------------------------
# Kernel 1: fused Transform (all LinearBlocks + final 1x1 conv), layout (C, M)
#   M = N*H*W on lanes, channels on sublanes.  1x1 conv == W @ X  (W is (Cout, Cin)).
#   BatchNorm2d train-mode stats = per-row (channel) mean/var over the M axis.
# ----------------------------------------------------------------------------
def _transform_fused_kernel(x_ref, wbn_ref, gbn_ref, bbn_ref, wf_ref, bf_ref,
                            o_ref, *, num_bn_layers):
    h = x_ref[...]                                                  # (C, M) f32
    for l in range(num_bn_layers):                                  # static unroll
        w = wbn_ref[l].astype(MXU_INPUT_DTYPE)                      # (C, C)
        y = jnp.dot(w, h.astype(MXU_INPUT_DTYPE),
                    preferred_element_type=jnp.float32)             # (C, M)
        # NOTE: the conv bias is intentionally dropped here -- a per-channel bias added
        # before train-mode BatchNorm cancels exactly (mean subtraction removes it).
        mean = jnp.mean(y, axis=1, keepdims=True)                   # (C, 1)
        var = jnp.mean((y - mean) ** 2, axis=1, keepdims=True)      # biased var (train BN)
        inv = jax.lax.rsqrt(var + BN_EPS)
        scale = gbn_ref[l] * inv                                    # fold BN to scale/shift
        shift = bbn_ref[l] - mean * scale
        h = jnp.maximum(y * scale + shift, 0.0)                     # BN + ReLU, one FMA + max
    # TODO(synk): BatchNorm2d running_mean / running_var updates (training side outputs)
    # are not produced; only the forward activation path is implemented.
    wf = wf_ref[...].astype(MXU_INPUT_DTYPE)
    y = jnp.dot(wf, h.astype(MXU_INPUT_DTYPE),
                preferred_element_type=jnp.float32) + bf_ref[...]   # final conv keeps its bias
    o_ref[...] = y.astype(o_ref.dtype)


# ----------------------------------------------------------------------------
# Kernel 2: PPM head, per image (grid over N, "parallel" for v7x megacore).
#   Refs are (C, P) with P = H*W.
# ----------------------------------------------------------------------------
def _pow_static(x, gamma):
    """x ** gamma with a static exponent; integer gammas avoid the EUP pow path."""
    g = float(gamma)
    if g == int(g) and 0 <= int(g) <= 8:
        gi = int(g)
        if gi == 0:
            return jnp.ones_like(x)
        out = x
        for _ in range(gi - 1):
            out = out * x
        return out
    return jnp.power(x, g)


def _ppm_head_kernel(x_ref, t_ref, o_ref, *, gamma):
    x = x_ref[...].astype(jnp.float32)                              # (C, P)
    t = t_ref[...].astype(jnp.float32)                              # (C, P)
    # F.normalize(dim=1): per-pixel L2 norm over the channel (sublane) axis.
    x_inv = 1.0 / jnp.maximum(jnp.sqrt(jnp.sum(x * x, axis=0, keepdims=True)), NORM_EPS)
    t_inv = 1.0 / jnp.maximum(jnp.sqrt(jnp.sum(t * t, axis=0, keepdims=True)), NORM_EPS)
    xn = x * x_inv
    tn = t * t_inv
    # sim = clamp(xn^T xn, 0) ** gamma : contract the channel axis of both operands.
    s = jax.lax.dot_general(xn, xn, (((0,), (0,)), ((), ())),
                            preferred_element_type=jnp.float32)     # (P, P)
    sim = _pow_static(jnp.maximum(s, 0.0), gamma)
    # res = tn @ sim^T ; sim is symmetric, so sim^T == sim (skip the XLU transpose).
    res = jnp.dot(tn, sim, preferred_element_type=jnp.float32)      # (C, P)
    o_ref[...] = res.astype(o_ref.dtype)


# ----------------------------------------------------------------------------
# pallas_call wrappers
# ----------------------------------------------------------------------------
def _full_spec(shape):
    return pl.BlockSpec(shape, lambda *_: (0,) * len(shape))


def transform_fused(x_cm, w_bn, g_bn, b_bn, w_f, b_f):
    """x_cm: (C, M) float32.  Returns (C, M) transform output."""
    C, M = x_cm.shape
    num_bn_layers = int(w_bn.shape[0])
    # Gate the whole-activation-resident fused plan on a conservative VMEM budget
    # (input + output + a few in-flight temporaries).
    approx_bytes = 6 * C * M * 4 + int(w_bn.size) * 4
    if approx_bytes > 40 * 1024 * 1024:
        # TODO(synk): add a tiled fallback (grid over M with two-pass BN: stats pass +
        # apply pass per layer) for activations that do not fit in VMEM.
        raise ValueError(f"fused Transform would need ~{approx_bytes} bytes of VMEM")
    kernel = functools.partial(_transform_fused_kernel, num_bn_layers=num_bn_layers)
    return pl.pallas_call(
        kernel,
        out_shape=jax.ShapeDtypeStruct((C, M), x_cm.dtype),
        grid=(),
        in_specs=[
            _full_spec((C, M)),
            _full_spec(tuple(w_bn.shape)),
            _full_spec(tuple(g_bn.shape)),
            _full_spec(tuple(b_bn.shape)),
            _full_spec((C, C)),
            _full_spec((C, 1)),
        ],
        out_specs=_full_spec((C, M)),
        compiler_params=pltpu.CompilerParams(vmem_limit_bytes=VMEM_LIMIT_BYTES),
    )(x_cm, w_bn, g_bn, b_bn, w_f, b_f)


def ppm_head(x_ncp, t_ncp, gamma):
    """x_ncp, t_ncp: (N, C, P).  Returns res: (N, C, P)."""
    N, C, P = x_ncp.shape
    kernel = functools.partial(_ppm_head_kernel, gamma=gamma)
    spec = pl.BlockSpec((None, C, P), lambda n: (n, 0, 0))
    return pl.pallas_call(
        kernel,
        out_shape=jax.ShapeDtypeStruct((N, C, P), x_ncp.dtype),
        grid=(N,),
        in_specs=[spec, spec],
        out_specs=spec,
        compiler_params=pltpu.CompilerParams(
            dimension_semantics=("parallel",),   # v7x: shard images across the 2 TCs
            vmem_limit_bytes=VMEM_LIMIT_BYTES,
        ),
    )(x_ncp, t_ncp)


# ----------------------------------------------------------------------------
# PPM forward
# ----------------------------------------------------------------------------
@functools.partial(jax.jit, static_argnames=("gamma",))
def ppm_forward(x_nchw, params, gamma):
    """x_nchw: (N, C, H, W) float32 -> res: (N, C, H, W) float32."""
    N, C, H, W = x_nchw.shape
    P = H * W
    M = N * P

    blocks = params["blocks"]
    assert len(blocks) >= 1, "Transform requires num_layers >= 2"
    w_bn = jnp.stack([w for (w, _b, _g, _be) in blocks])                # (L-1, C, C)
    g_bn = jnp.stack([g for (_w, _b, g, _be) in blocks])[..., None]     # (L-1, C, 1)
    b_bn = jnp.stack([be for (_w, _b, _g, be) in blocks])[..., None]    # (L-1, C, 1)
    w_f, b_f = params["final"]

    # Transform in channels-on-sublanes / tokens-on-lanes layout (C, N*H*W).
    x_cm = jnp.transpose(x_nchw, (1, 0, 2, 3)).reshape(C, M)
    t_cm = transform_fused(x_cm, w_bn, g_bn, b_bn, w_f, b_f.reshape(C, 1))   # (C, M)

    # PPM head: per-image similarity + propagation.
    t_ncp = jnp.transpose(t_cm.reshape(C, N, P), (1, 0, 2))                  # (N, C, P)
    x_ncp = x_nchw.reshape(N, C, P)
    res = ppm_head(x_ncp, t_ncp, gamma)                                      # (N, C, P)
    return res.reshape(N, C, H, W)


# ----------------------------------------------------------------------------
# Parameter init (matches the PyTorch module's shapes / defaults)
# ----------------------------------------------------------------------------
def init_ppm_params(key, num_feat, num_layers):
    assert num_layers >= 2
    params = {"blocks": [], "final": None}
    bound = 1.0 / float(num_feat) ** 0.5
    for _ in range(num_layers - 1):
        key, kw, kb = jax.random.split(key, 3)
        w = jax.random.uniform(kw, (num_feat, num_feat), jnp.float32, -bound, bound)
        b = jax.random.uniform(kb, (num_feat,), jnp.float32, -bound, bound)
        gamma = jnp.ones((num_feat,), jnp.float32)   # BatchNorm2d default weight
        beta = jnp.zeros((num_feat,), jnp.float32)   # BatchNorm2d default bias
        params["blocks"].append((w, b, gamma, beta))
    key, kw, kb = jax.random.split(key, 3)
    wf = jax.random.uniform(kw, (num_feat, num_feat), jnp.float32, -bound, bound)
    bf = jax.random.uniform(kb, (num_feat,), jnp.float32, -bound, bound)
    params["final"] = (wf, bf)
    return params


# ----------------------------------------------------------------------------
# Pure-JAX reference (full PyTorch semantics, including the pre-BN conv bias)
# ----------------------------------------------------------------------------
def ppm_reference(x_nchw, params, gamma):
    hp = jax.lax.Precision.HIGHEST
    N, C, H, W = x_nchw.shape
    h = x_nchw.reshape(N, C, H * W)
    for (w, b, g, be) in params["blocks"]:
        y = jnp.einsum("oc,ncp->nop", w, h, precision=hp) + b[None, :, None]
        mean = jnp.mean(y, axis=(0, 2), keepdims=True)
        var = jnp.mean((y - mean) ** 2, axis=(0, 2), keepdims=True)
        yh = (y - mean) / jnp.sqrt(var + BN_EPS)
        h = jnp.maximum(yh * g[None, :, None] + be[None, :, None], 0.0)
    wf, bf = params["final"]
    t = jnp.einsum("oc,ncp->nop", wf, h, precision=hp) + bf[None, :, None]
    xf = x_nchw.reshape(N, C, H * W)
    tn = t / jnp.maximum(jnp.linalg.norm(t, axis=1, keepdims=True), NORM_EPS)
    xn = xf / jnp.maximum(jnp.linalg.norm(xf, axis=1, keepdims=True), NORM_EPS)
    s = jnp.einsum("nci,ncj->nij", xn, xn, precision=hp)
    sim = jnp.power(jnp.maximum(s, 0.0), float(gamma))
    res = jnp.einsum("nck,npk->ncp", tn, sim, precision=hp)   # t @ sim^T
    return res.reshape(N, C, H, W)


# ----------------------------------------------------------------------------
if __name__ == "__main__":
    num_feat = 32
    num_layers = 3
    ppm_gamma = 2.0
    N, H, W = 2, 8, 8

    key = jax.random.PRNGKey(0)
    key, kx, kp = jax.random.split(key, 3)
    x = jax.random.normal(kx, (N, num_feat, H, W), dtype=jnp.float32)
    params = init_ppm_params(kp, num_feat, num_layers)

    out = ppm_forward(x, params, gamma=ppm_gamma)
    jax.block_until_ready(out)
    assert out.shape == (N, num_feat, H, W), out.shape

    ref = ppm_reference(x, params, ppm_gamma)
    max_err = float(jnp.max(jnp.abs(out - ref)))
    assert bool(jnp.allclose(out, ref, rtol=2e-3, atol=2e-3)), max_err

    print("KERNEL_OK")
</pallas_src>

<mosaic_0001>
module attributes {stable_mosaic.version = 11 : i64} {
  func.func @_transform_fused_kernel(%arg0: memref<32x128xf32, #tpu.memory_space<vmem>>, %arg1: memref<2x32x32xf32, #tpu.memory_space<vmem>>, %arg2: memref<2x32x1xf32, #tpu.memory_space<vmem>>, %arg3: memref<2x32x1xf32, #tpu.memory_space<vmem>>, %arg4: memref<32x32xf32, #tpu.memory_space<vmem>>, %arg5: memref<32x1xf32, #tpu.memory_space<vmem>>, %arg6: memref<32x128xf32, #tpu.memory_space<vmem>>) attributes {dimension_semantics = [], scalar_prefetch = 0 : i64, scratch_operands = 0 : i64, tpu.core_type = #tpu.core_type<tc>} {
    %c0 = arith.constant 0 : index
    %c0_0 = arith.constant 0 : index
    %0 = vector.load %arg0[%c0, %c0_0] : memref<32x128xf32, #tpu.memory_space<vmem>>, vector<32x128xf32>
    %c0_1 = arith.constant 0 : index
    %c0_2 = arith.constant 0 : index
    %c0_3 = arith.constant 0 : index
    %1 = vector.load %arg1[%c0_1, %c0_2, %c0_3] : memref<2x32x32xf32, #tpu.memory_space<vmem>>, vector<1x32x32xf32>
    %2 = vector.shape_cast %1 : vector<1x32x32xf32> to vector<32x32xf32>
    %cst = arith.constant dense<0.000000e+00> : vector<32x128xf32>
    %3 = tpu.matmul %2, %0, %cst {dimension_numbers = #tpu.dot_dimension_numbers<[1], [0], [0], [1], [0, 0, 1, 1], [], []>} : vector<32x32xf32>, vector<32x128xf32>, vector<32x128xf32> -> vector<32x128xf32>
    %cst_4 = arith.constant dense<0.000000e+00> : vector<32xf32>
    %4 = vector.multi_reduction <add>, %3, %cst_4 [1] : vector<32x128xf32> to vector<32xf32>
    %5 = vector.shape_cast %4 : vector<32xf32> to vector<32x1xf32>
    %cst_5 = arith.constant 1.280000e+02 : f32
    %6 = vector.broadcast %cst_5 : f32 to vector<32x1xf32>
    %7 = arith.divf %5, %6 : vector<32x1xf32>
    %8 = vector.broadcast %7 : vector<32x1xf32> to vector<32x128xf32>
    %9 = arith.subf %3, %8 : vector<32x128xf32>
    %10 = arith.mulf %9, %9 : vector<32x128xf32>
    %cst_6 = arith.constant dense<0.000000e+00> : vector<32xf32>
    %11 = vector.multi_reduction <add>, %10, %cst_6 [1] : vector<32x128xf32> to vector<32xf32>
    %12 = vector.shape_cast %11 : vector<32xf32> to vector<32x1xf32>
    %cst_7 = arith.constant 1.280000e+02 : f32
    %13 = vector.broadcast %cst_7 : f32 to vector<32x1xf32>
    %14 = arith.divf %12, %13 : vector<32x1xf32>
    %cst_8 = arith.constant 9.99999974E-6 : f32
    %15 = vector.broadcast %cst_8 : f32 to vector<32x1xf32>
    %16 = arith.addf %14, %15 : vector<32x1xf32>
    %17 = math.rsqrt %16 : vector<32x1xf32>
    %c0_9 = arith.constant 0 : index
    %c0_10 = arith.constant 0 : index
    %c0_11 = arith.constant 0 : index
    %18 = vector.load %arg2[%c0_9, %c0_10, %c0_11] : memref<2x32x1xf32, #tpu.memory_space<vmem>>, vector<1x32x1xf32>
    %19 = vector.shape_cast %18 : vector<1x32x1xf32> to vector<32x1xf32>
    %20 = arith.mulf %19, %17 : vector<32x1xf32>
    %c0_12 = arith.constant 0 : index
    %c0_13 = arith.constant 0 : index
    %c0_14 = arith.constant 0 : index
    %21 = vector.load %arg3[%c0_12, %c0_13, %c0_14] : memref<2x32x1xf32, #tpu.memory_space<vmem>>, vector<1x32x1xf32>
    %22 = vector.shape_cast %21 : vector<1x32x1xf32> to vector<32x1xf32>
    %23 = arith.mulf %7, %20 : vector<32x1xf32>
    %24 = arith.subf %22, %23 : vector<32x1xf32>
    %25 = vector.broadcast %20 : vector<32x1xf32> to vector<32x128xf32>
    %26 = arith.mulf %3, %25 : vector<32x128xf32>
    %27 = vector.broadcast %24 : vector<32x1xf32> to vector<32x128xf32>
    %28 = arith.addf %26, %27 : vector<32x128xf32>
    %cst_15 = arith.constant 0.000000e+00 : f32
    %29 = vector.broadcast %cst_15 : f32 to vector<32x128xf32>
    %30 = arith.maximumf %28, %29 : vector<32x128xf32>
    %c1 = arith.constant 1 : index
    %c0_16 = arith.constant 0 : index
    %c0_17 = arith.constant 0 : index
    %31 = vector.load %arg1[%c1, %c0_16, %c0_17] : memref<2x32x32xf32, #tpu.memory_space<vmem>>, vector<1x32x32xf32>
    %32 = vector.shape_cast %31 : vector<1x32x32xf32> to vector<32x32xf32>
    %cst_18 = arith.constant dense<0.000000e+00> : vector<32x128xf32>
    %33 = tpu.matmul %32, %30, %cst_18 {dimension_numbers = #tpu.dot_dimension_numbers<[1], [0], [0], [1], [0, 0, 1, 1], [], []>} : vector<32x32xf32>, vector<32x128xf32>, vector<32x128xf32> -> vector<32x128xf32>
    %cst_19 = arith.constant dense<0.000000e+00> : vector<32xf32>
    %34 = vector.multi_reduction <add>, %33, %cst_19 [1] : vector<32x128xf32> to vector<32xf32>
    %35 = vector.shape_cast %34 : vector<32xf32> to vector<32x1xf32>
    %cst_20 = arith.constant 1.280000e+02 : f32
    %36 = vector.broadcast %cst_20 : f32 to vector<32x1xf32>
    %37 = arith.divf %35, %36 : vector<32x1xf32>
    %38 = vector.broadcast %37 : vector<32x1xf32> to vector<32x128xf32>
    %39 = arith.subf %33, %38 : vector<32x128xf32>
    %40 = arith.mulf %39, %39 : vector<32x128xf32>
    %cst_21 = arith.constant dense<0.000000e+00> : vector<32xf32>
    %41 = vector.multi_reduction <add>, %40, %cst_21 [1] : vector<32x128xf32> to vector<32xf32>
    %42 = vector.shape_cast %41 : vector<32xf32> to vector<32x1xf32>
    %cst_22 = arith.constant 1.280000e+02 : f32
    %43 = vector.broadcast %cst_22 : f32 to vector<32x1xf32>
    %44 = arith.divf %42, %43 : vector<32x1xf32>
    %cst_23 = arith.constant 9.99999974E-6 : f32
    %45 = vector.broadcast %cst_23 : f32 to vector<32x1xf32>
    %46 = arith.addf %44, %45 : vector<32x1xf32>
    %47 = math.rsqrt %46 : vector<32x1xf32>
    %c1_24 = arith.constant 1 : index
    %c0_25 = arith.constant 0 : index
    %c0_26 = arith.constant 0 : index
    %48 = vector.load %arg2[%c1_24, %c0_25, %c0_26] : memref<2x32x1xf32, #tpu.memory_space<vmem>>, vector<1x32x1xf32>
    %49 = vector.shape_cast %48 : vector<1x32x1xf32> to vector<32x1xf32>
    %50 = arith.mulf %49, %47 : vector<32x1xf32>
    %c1_27 = arith.constant 1 : index
    %c0_28 = arith.constant 0 : index
    %c0_29 = arith.constant 0 : index
    %51 = vector.load %arg3[%c1_27, %c0_28, %c0_29] : memref<2x32x1xf32, #tpu.memory_space<vmem>>, vector<1x32x1xf32>
    %52 = vector.shape_cast %51 : vector<1x32x1xf32> to vector<32x1xf32>
    %53 = arith.mulf %37, %50 : vector<32x1xf32>
    %54 = arith.subf %52, %53 : vector<32x1xf32>
    %55 = vector.broadcast %50 : vector<32x1xf32> to vector<32x128xf32>
    %56 = arith.mulf %33, %55 : vector<32x128xf32>
    %57 = vector.broadcast %54 : vector<32x1xf32> to vector<32x128xf32>
    %58 = arith.addf %56, %57 : vector<32x128xf32>
    %cst_30 = arith.constant 0.000000e+00 : f32
    %59 = vector.broadcast %cst_30 : f32 to vector<32x128xf32>
    %60 = arith.maximumf %58, %59 : vector<32x128xf32>
    %c0_31 = arith.constant 0 : index
    %c0_32 = arith.constant 0 : index
    %61 = vector.load %arg4[%c0_31, %c0_32] : memref<32x32xf32, #tpu.memory_space<vmem>>, vector<32x32xf32>
    %cst_33 = arith.constant dense<0.000000e+00> : vector<32x128xf32>
    %62 = tpu.matmul %61, %60, %cst_33 {dimension_numbers = #tpu.dot_dimension_numbers<[1], [0], [0], [1], [0, 0, 1, 1], [], []>} : vector<32x32xf32>, vector<32x128xf32>, vector<32x128xf32> -> vector<32x128xf32>
    %c0_34 = arith.constant 0 : index
    %c0_35 = arith.constant 0 : index
    %63 = vector.load %arg5[%c0_34, %c0_35] : memref<32x1xf32, #tpu.memory_space<vmem>>, vector<32x1xf32>
    %64 = vector.broadcast %63 : vector<32x1xf32> to vector<32x128xf32>
    %65 = arith.addf %62, %64 : vector<32x128xf32>
    %c0_36 = arith.constant 0 : index
    %c0_37 = arith.constant 0 : index
    %66 = vector.load %arg6[%c0_36, %c0_37] : memref<32x128xf32, #tpu.memory_space<vmem>>, vector<32x128xf32>
    tpu.vector_store %arg6[%c0_36, %c0_37], %65 {strides = array<i32>} : memref<32x128xf32, #tpu.memory_space<vmem>>, vector<32x128xf32>,
    return
  }
}

module attributes {stable_mosaic.version = 11 : i64} {
  func.func @_ppm_head_kernel(%arg0: i32, %arg1: memref<1x32x64xf32, #tpu.memory_space<vmem>>, %arg2: memref<1x32x64xf32, #tpu.memory_space<vmem>>, %arg3: memref<1x32x64xf32, #tpu.memory_space<vmem>>) attributes {dimension_semantics = [#tpu.dimension_semantics<parallel>], iteration_bounds = array<i64: 2>, scalar_prefetch = 0 : i64, scratch_operands = 0 : i64, tpu.core_type = #tpu.core_type<tc>, window_params = [{transform_indices = @transform_0, window_bounds = array<i64: 1, 32, 64>}, {transform_indices = @transform_1, window_bounds = array<i64: 1, 32, 64>}, {transform_indices = @transform_2, window_bounds = array<i64: 1, 32, 64>}]} {
    %c0 = arith.constant 0 : index
    %c0_0 = arith.constant 0 : index
    %c0_1 = arith.constant 0 : index
    %0 = vector.load %arg1[%c0, %c0_0, %c0_1] : memref<1x32x64xf32, #tpu.memory_space<vmem>>, vector<1x32x64xf32>
    %1 = vector.shape_cast %0 : vector<1x32x64xf32> to vector<32x64xf32>
    %c0_2 = arith.constant 0 : index
    %c0_3 = arith.constant 0 : index
    %c0_4 = arith.constant 0 : index
    %2 = vector.load %arg2[%c0_2, %c0_3, %c0_4] : memref<1x32x64xf32, #tpu.memory_space<vmem>>, vector<1x32x64xf32>
    %3 = vector.shape_cast %2 : vector<1x32x64xf32> to vector<32x64xf32>
    %4 = arith.mulf %1, %1 : vector<32x64xf32>
    %cst = arith.constant dense<0.000000e+00> : vector<64xf32>
    %5 = vector.multi_reduction <add>, %4, %cst [0] : vector<32x64xf32> to vector<64xf32>
    %6 = vector.shape_cast %5 : vector<64xf32> to vector<1x64xf32>
    %7 = math.sqrt %6 : vector<1x64xf32>
    %cst_5 = arith.constant 9.99999996E-13 : f32
    %8 = vector.broadcast %cst_5 : f32 to vector<1x64xf32>
    %9 = arith.maximumf %7, %8 : vector<1x64xf32>
    %cst_6 = arith.constant 1.000000e+00 : f32
    %10 = vector.broadcast %cst_6 : f32 to vector<1x64xf32>
    %11 = arith.divf %10, %9 : vector<1x64xf32>
    %12 = arith.mulf %3, %3 : vector<32x64xf32>
    %cst_7 = arith.constant dense<0.000000e+00> : vector<64xf32>
    %13 = vector.multi_reduction <add>, %12, %cst_7 [0] : vector<32x64xf32> to vector<64xf32>
    %14 = vector.shape_cast %13 : vector<64xf32> to vector<1x64xf32>
    %15 = math.sqrt %14 : vector<1x64xf32>
    %cst_8 = arith.constant 9.99999996E-13 : f32
    %16 = vector.broadcast %cst_8 : f32 to vector<1x64xf32>
    %17 = arith.maximumf %15, %16 : vector<1x64xf32>
    %cst_9 = arith.constant 1.000000e+00 : f32
    %18 = vector.broadcast %cst_9 : f32 to vector<1x64xf32>
    %19 = arith.divf %18, %17 : vector<1x64xf32>
    %20 = vector.broadcast %11 : vector<1x64xf32> to vector<32x64xf32>
    %21 = arith.mulf %1, %20 : vector<32x64xf32>
    %22 = vector.broadcast %19 : vector<1x64xf32> to vector<32x64xf32>
    %23 = arith.mulf %3, %22 : vector<32x64xf32>
    %cst_10 = arith.constant dense<0.000000e+00> : vector<64x64xf32>
    %24 = tpu.matmul %21, %21, %cst_10 {dimension_numbers = #tpu.dot_dimension_numbers<[0], [0], [1], [1], [0, 1, 1, 1], [], []>} : vector<32x64xf32>, vector<32x64xf32>, vector<64x64xf32> -> vector<64x64xf32>
    %cst_11 = arith.constant 0.000000e+00 : f32
    %25 = vector.broadcast %cst_11 : f32 to vector<64x64xf32>
    %26 = arith.maximumf %24, %25 : vector<64x64xf32>
    %27 = arith.mulf %26, %26 : vector<64x64xf32>
    %cst_12 = arith.constant dense<0.000000e+00> : vector<32x64xf32>
    %28 = tpu.matmul %23, %27, %cst_12 {dimension_numbers = #tpu.dot_dimension_numbers<[1], [0], [0], [1], [0, 0, 1, 1], [], []>} : vector<32x64xf32>, vector<64x64xf32>, vector<32x64xf32> -> vector<32x64xf32>
    %c0_13 = arith.constant 0 : index
    %c0_14 = arith.constant 0 : index
    %c0_15 = arith.constant 0 : index
    %29 = vector.load %arg3[%c0_13, %c0_14, %c0_15] : memref<1x32x64xf32, #tpu.memory_space<vmem>>, vector<1x32x64xf32>
    %30 = vector.shape_cast %29 : vector<1x32x64xf32> to vector<32x64xf32>
    %31 = vector.shape_cast %28 : vector<32x64xf32> to vector<1x32x64xf32>
    tpu.vector_store %arg3[%c0_13, %c0_14, %c0_15], %31 {strides = array<i32>} : memref<1x32x64xf32, #tpu.memory_space<vmem>>, vector<1x32x64xf32>,
    return
  }
  func.func @transform_0(%arg0: i32) -> (i32, i32, i32) {
    %c0_i32 = arith.constant 0 : i32
    %c0_i32_0 = arith.constant 0 : i32
    %c0_i32_1 = arith.constant 0 : i32
    return %arg0, %c0_i32, %c0_i32_0 : i32, i32, i32
  }
  func.func @transform_1(%arg0: i32) -> (i32, i32, i32) {
    %c0_i32 = arith.constant 0 : i32
    %c0_i32_0 = arith.constant 0 : i32
    %c0_i32_1 = arith.constant 0 : i32
    return %arg0, %c0_i32, %c0_i32_0 : i32, i32, i32
  }
  func.func @transform_2(%arg0: i32) -> (i32, i32, i32) {
    %c0_i32 = arith.constant 0 : i32
    %c0_i32_0 = arith.constant 0 : i32
    %c0_i32_1 = arith.constant 0 : i32
    return %arg0, %c0_i32, %c0_i32_0 : i32, i32, i32
  }
}

</mosaic_0001>

<llo_original>
// kernel: ppm_forward.3
$region0: #{ppm_forward.3}
  #allocation0 [shape = 'u32[]', space=smem, size = 0x4, offset = 0x4, fixed_abs, tag = 'smem constant byte address 0x4 - core index']
  #allocation1 [shape = 'u32[144,128]{1,0:T(1,128)}', space=vmem, size = 0x12000, scoped, tag = 'internal scratch']
  %s0 = inlined_call_operand.vmem [shape: f32[2,32,64], index: 0, kind: input, shape index: {}]
  %s1 = inlined_call_operand.vmem [shape: f32[2,32,64], index: 1, kind: input, shape index: {}]
  %s2 = inlined_call_operand.vmem [shape: f32[2,32,64], index: 2, kind: output, shape index: {}]
  %s3 = sld [smem:[#allocation0]]
  $region41: #{ppm_forward.3} parent=0
    _
  %s5 = ssub.s32 1, %s3
  %s6 = scalar_select 0, %s5, %s3
  loop: start=0, step=1, limit=4
  $region2: #{ppm_forward.3} parent=0 // loop_pre_header
    _
  $region3: #{ppm_forward.3} parent=0 // loop_header
    %s8 = sphi 0, %s12
    %p9 = scmp.ge.s32.totalorder %s8, 4
    %s18 = sphi 0, %s20
    %s21 = sphi 0, %s18
    %s22 = sphi 0, %s21
    %s38 = sphi 0, %s22
    %s44 = sphi 0, %s46
    %s47 = sphi 0, %s44
    %s48 = sphi 0, %s47
    %s64 = sphi 0, %s48
    %s70 = sphi 0, %s72
    %s73 = sphi 0, %s70
    %s74 = sphi 0, %s73
    %s90 = sphi 0, %s74
  $region4: #{ppm_forward.3} parent=0 // loop_header_branch
    %11 = sbr.rel (%p9) target = $region8
  $region5: #{ppm_forward.3} parent=0 // loop_body
    %s13 = ssub.s32 %s8, 1
    %s14 = ssub.s32 %s8, 2
    %s15 = sadd.s32 %s8, 1
    %s16 = ssub.s32 %s8, %s15
    %p17 = scmp.eq.s32.totalorder %s16, 0
    %s19 = sadd.s32 %s18, 1
    %s20 = scalar_select %p17, %s18, %s19
    %p23 = pneg %p17
    %p24 = scmp.eq.s32.totalorder %s8, 1
    %p25 = por %p23, %p24
    %p26 = scmp.ne.s32.totalorder %s18, %s21
    %p27 = scmp.eq.s32.totalorder %s8, 0
    %p28 = por %p26, %p27
    %p29 = scmp.ne.s32.totalorder %s18, %s21
    %p30 = scmp.eq.s32.totalorder %s13, 1
    %p31 = por %p29, %p30
    %p32 = scmp.ne.s32.totalorder %s21, %s22
    %p33 = scmp.eq.s32.totalorder %s13, 0
    %p34 = por %p32, %p33
    %p35 = scmp.ne.s32.totalorder %s21, %s22
    %p36 = scmp.eq.s32.totalorder %s14, 1
    %p37 = por %p35, %p36
    %p39 = scmp.ne.s32.totalorder %s22, %s38
    %p40 = scmp.eq.s32.totalorder %s14, 0
    %p41 = por %p39, %p40
    %s42 = ssub.s32 %s8, %s15
    %p43 = scmp.eq.s32.totalorder %s42, 0
    %s45 = sadd.s32 %s44, 1
    %s46 = scalar_select %p43, %s44, %s45
    %p49 = pneg %p43
    %p50 = scmp.eq.s32.totalorder %s8, 1
    %p51 = por %p49, %p50
    %p52 = scmp.ne.s32.totalorder %s44, %s47
    %p53 = scmp.eq.s32.totalorder %s8, 0
    %p54 = por %p52, %p53
    %p55 = scmp.ne.s32.totalorder %s44, %s47
    %p56 = scmp.eq.s32.totalorder %s13, 1
    %p57 = por %p55, %p56
    %p58 = scmp.ne.s32.totalorder %s47, %s48
    %p59 = scmp.eq.s32.totalorder %s13, 0
    %p60 = por %p58, %p59
    %p61 = scmp.ne.s32.totalorder %s47, %s48
    %p62 = scmp.eq.s32.totalorder %s14, 1
    %p63 = por %p61, %p62
    %p65 = scmp.ne.s32.totalorder %s48, %s64
    %p66 = scmp.eq.s32.totalorder %s14, 0
    %p67 = por %p65, %p66
    %s68 = ssub.s32 %s8, %s15
    %p69 = scmp.eq.s32.totalorder %s68, 0
    %s71 = sadd.s32 %s70, 1
    %s72 = scalar_select %p69, %s70, %s71
    %p75 = pneg %p69
    %p76 = scmp.eq.s32.totalorder %s8, 1
    %p77 = por %p75, %p76
    %p78 = scmp.ne.s32.totalorder %s70, %s73
    %p79 = scmp.eq.s32.totalorder %s8, 0
    %p80 = por %p78, %p79
    %p81 = scmp.ne.s32.totalorder %s70, %s73
    %p82 = scmp.eq.s32.totalorder %s13, 1
    %p83 = por %p81, %p82
    %p84 = scmp.ne.s32.totalorder %s73, %s74
    %p85 = scmp.eq.s32.totalorder %s13, 0
    %p86 = por %p84, %p85
    %p87 = scmp.ne.s32.totalorder %s73, %s74
    %p88 = scmp.eq.s32.totalorder %s14, 1
    %p89 = por %p87, %p88
    %p91 = scmp.ne.s32.totalorder %s74, %s90
    %p92 = scmp.eq.s32.totalorder %s14, 0
    %p93 = por %p91, %p92
    %p94 = scmp.le.s32.totalorder 1, %s8
    %p95 = scmp.lt.s32.totalorder %s8, 3
    %p96 = pnand %p94, %p95
    %p97 = pneg %p96
    // Predicated region
    $region9: #{ppm_forward.3} parent=5 // pred_check
      _
    $region10: #{ppm_forward.3} parent=5 // pred_check_branch
      %99 = sbr.rel (%p96) target = $region12
    $region11: #{ppm_forward.3} parent=5 // pred_region
      %s100 = ssub.s32 %s8, 1
    $region12: #{ppm_forward.3} parent=5 // pred_fallthru
      _
    %p101 = scmp.lt.s32.totalorder %s8, 2
    // Predicated region
    $region13: #{ppm_forward.3} parent=5 // pred_check
      %p102 = pneg %p101
    $region14: #{ppm_forward.3} parent=5 // pred_check_branch
      %104 = sbr.rel (%p102) target = $region16
    $region15: #{ppm_forward.3} parent=5 // pred_region
      // Predicated region
      $region17: #{ppm_forward.3} parent=15 // pred_check
        %p105 = pneg %p28
      $region18: #{ppm_forward.3} parent=15 // pred_check_branch
        %107 = sbr.rel (%p105) target = $region20
      $region19: #{ppm_forward.3} parent=15 // pred_region
        %p108 = scmp.lt.s32.totalorder %s8, 1
        %s109 = scalar_select %p108, %s8, 1
        %s110 = smul.addr %s109, 4
        %s111 = smul.addr %s110, 8
        %s112 = scalar_lea.vmem %s0, %s111
      $region20: #{ppm_forward.3} parent=15 // pred_fallthru
        _
      // Predicated region
      $region21: #{ppm_forward.3} parent=15 // pred_check
        %p113 = pneg %p54
      $region22: #{ppm_forward.3} parent=15 // pred_check_branch
        %115 = sbr.rel (%p113) target = $region24
      $region23: #{ppm_forward.3} parent=15 // pred_region
        %p116 = scmp.lt.s32.totalorder %s8, 1
        %s117 = scalar_select %p116, %s8, 1
        %s118 = smul.addr %s117, 4
        %s119 = smul.addr %s118, 8
        %s120 = scalar_lea.vmem %s1, %s119
      $region24: #{ppm_forward.3} parent=15 // pred_fallthru
        _
    $region16: #{ppm_forward.3} parent=5 // pred_fallthru
      _
    %p121 = scmp.le.s32.totalorder 1, %s8
    %p122 = scmp.lt.s32.totalorder %s8, 3
    %p123 = pnand %p121, %p122
    %p124 = pneg %p123
    // Predicated region
    $region25: #{ppm_forward.3} parent=5 // pred_check
      _
    $region26: #{ppm_forward.3} parent=5 // pred_check_branch
      %126 = sbr.rel (%p123) target = $region28
    $region27: #{ppm_forward.3} parent=5 // pred_region
      %s127 = ssub.s32 %s8, 1
      %p128 = scmp.lt.s32.totalorder %s13, 1
      %s129 = scalar_select %p128, %s13, 1
      %s130 = smul.addr %s129, 4
      %s131 = smul.addr %s130, 8
      %s132 = scalar_lea.vmem %s0, %s131
      %p133 = pneg %p34
      %p134 = pneg %p31
      %p135 = scmp.lt.s32.totalorder %s13, 1
      %s136 = scalar_select %p135, %s13, 1
      %s137 = smul.addr %s136, 4
      %s138 = smul.addr %s137, 8
      %s139 = scalar_lea.vmem %s1, %s138
      %p140 = pneg %p60
      %p141 = pneg %p57
      %p142 = pneg %p86
      %p143 = pneg %p83
      %p144 = scmp.lt.s32.totalorder %s13, 1
      %s145 = scalar_select %p144, %s13, 1
      %s146 = smul.addr %s145, 4
      %s147 = smul.addr %s146, 8
      %s148 = scalar_lea.vmem %s2, %s147
      %p149 = scmp.lt.s32.totalorder %s13, 1
      %s150 = scalar_select %p149, %s13, 1
      %s151 = smul.addr %s150, 4
      %s152 = smul.addr %s151, 8
      %s153 = scalar_lea.vmem %s0, %s152
      %p154 = scmp.lt.s32.totalorder %s13, 1
      %s155 = scalar_select %p154, %s13, 1
      %s156 = smul.addr %s155, 4
      %s157 = smul.addr %s156, 8
      %s158 = scalar_lea.vmem %s1, %s157
      %p159 = scmp.lt.s32.totalorder %s13, 1
      %s160 = scalar_select %p159, %s13, 1
      %s161 = smul.addr %s160, 4
      %s162 = smul.addr %s161, 8
      %s163 = scalar_lea.vmem %s2, %s162
      %v164 = vld [vmem:[%s153] sm:$0xff]
      %v165 = vld [vmem:[%s153 + $0x8] sm:$0xff]
      %v166 = vld [vmem:[%s153 + $0x10] sm:$0xff]
      %v167 = vld [vmem:[%s153 + $0x18] sm:$0xff]
      %v168 = vld [vmem:[%s158] sm:$0xff]
      %v169 = vld [vmem:[%s158 + $0x8] sm:$0xff]
      %v170 = vld [vmem:[%s158 + $0x10] sm:$0xff]
      %v171 = vld [vmem:[%s158 + $0x18] sm:$0xff]
      %v172 = vmul.f32 %v164, %v164
      %v173 = vmul.f32 %v165, %v165
      %v174 = vmul.f32 %v166, %v166
      %v175 = vmul.f32 %v167, %v167
      %vm176 = vcmask 523264
      %v177 = vsel %vm176, %v172, 0.0
      %v178 = vsel %vm176, %v173, 0.0
      %v179 = vadd.f32 %v177, %v178
      %v180 = vsel %vm176, %v174, 0.0
      %v181 = vadd.f32 %v179, %v180
      %v182 = vsel %vm176, %v175, 0.0
      %v183 = vadd.f32 %v181, %v182
      %v184 = vrot.slane %v183, 4
      %v185 = vadd.f32 %v183, %v184
      %v186 = vrot.slane %v185, 2
      %v187 = vadd.f32 %v185, %v186
      %v188 = vrot.slane %v187, 1
      %v189 = vadd.f32 %v187, %v188
      %v190 = vrsqrt.pop %v189
      %v191 = vmul.f32 %v189, %v190
      %vm192 = vcmp.eq.f32.partialorder %v189, inf
      %v193 = vsel %vm192, %v189, %v191
      %vm194 = vcmp.eq.f32.partialorder %v189, 0.0
      %v195 = vand.u32 %v189, 2147483648
      %v196 = vsel %vm194, %v195, %v193
      %v197 = vmax.f32 %v196, 1e-12
      %v198 = vrcp.pop %v197
      %v199 = vmul.f32 1.0, %v198
      %v200 = vmul.f32 %v168, %v168
      %v201 = vmul.f32 %v169, %v169
      %v202 = vmul.f32 %v170, %v170
      %v203 = vmul.f32 %v171, %v171
      %v204 = vsel %vm176, %v200, 0.0
      %v205 = vsel %vm176, %v201, 0.0
      %v206 = vadd.f32 %v204, %v205
      %v207 = vsel %vm176, %v202, 0.0
      %v208 = vadd.f32 %v206, %v207
      %v209 = vsel %vm176, %v203, 0.0
      %v210 = vadd.f32 %v208, %v209
      %v211 = vrot.slane %v210, 4
      %v212 = vadd.f32 %v210, %v211
      %v213 = vrot.slane %v212, 2
      %v214 = vadd.f32 %v212, %v213
      %v215 = vrot.slane %v214, 1
      %v216 = vadd.f32 %v214, %v215
      %v217 = vrsqrt.pop %v216
      %v218 = vmul.f32 %v216, %v217
      %vm219 = vcmp.eq.f32.partialorder %v216, inf
      %v220 = vsel %vm219, %v216, %v218
      %vm221 = vcmp.eq.f32.partialorder %v216, 0.0
      %v222 = vand.u32 %v216, 2147483648
      %v223 = vsel %vm221, %v222, %v220
      %v224 = vmax.f32 %v223, 1e-12
      %v225 = vrcp.pop %v224
      %v226 = vmul.f32 1.0, %v225
      %v227 = vmul.f32 %v164, %v199
      %v228 = vmul.f32 %v165, %v199
      %v229 = vmul.f32 %v166, %v199
      %v230 = vmul.f32 %v167, %v199
      %v231 = vmul.f32 %v168, %v226
      %v232 = vmul.f32 %v169, %v226
      %v233 = vmul.f32 %v170, %v226
      %v234 = vmul.f32 %v171, %v226
      %235 = vxpose.xlu0.b32.start [1/16] %v227, 128
      %236 = vxpose.xlu0.b32.cont [2/16] %v228, 128
      %237 = vxpose.xlu0.b32.cont [3/16] %v229, 128
      %238 = vxpose.xlu0.b32.cont [4/16] %v230, 128
      %239 = vxpose.xlu0.b32.cont [5/16] 0.0, 128
      %240 = vxpose.xlu0.b32.cont [6/16] 0.0, 128
      %241 = vxpose.xlu0.b32.cont [7/16] 0.0, 128
      %242 = vxpose.xlu0.b32.cont [8/16] 0.0, 128
      %243 = vxpose.xlu0.b32.cont [9/16] 0.0, 128
      %244 = vxpose.xlu0.b32.cont [10/16] 0.0, 128
      %245 = vxpose.xlu0.b32.cont [11/16] 0.0, 128
      %246 = vxpose.xlu0.b32.cont [12/16] 0.0, 128
      %247 = vxpose.xlu0.b32.cont [13/16] 0.0, 128
      %248 = vxpose.xlu0.b32.cont [14/16] 0.0, 128
      %249 = vxpose.xlu0.b32.cont [15/16] 0.0, 128
      %250 = vxpose.xlu0.b32.end [16/16] 0.0, 128
      %v251 = vpop.trf.xlu0
      %v252 = vpop.trf.xlu0
      %v253 = vpop.trf.xlu0
      %v254 = vpop.trf.xlu0
      %v255 = vpop.trf.xlu0
      %v256 = vpop.trf.xlu0
      %v257 = vpop.trf.xlu0
      %v258 = vpop.trf.xlu0
      %v259 = vpop.trf.xlu0
      %v260 = vpop.trf.xlu0
      %v261 = vpop.trf.xlu0
      %v262 = vpop.trf.xlu0
      %v263 = vpop.trf.xlu0
      %v264 = vpop.trf.xlu0
      %v265 = vpop.trf.xlu0
      %v266 = vpop.trf.xlu0
      %vm267 = vcmask 261120
      %v269 = vsel %vm267, %v251, 0
      %v272 = vsel %vm267, %v252, 0
      %v275 = vsel %vm267, %v253, 0
      %v278 = vsel %vm267, %v254, 0
      %v281 = vsel %vm267, %v255, 0
      %v284 = vsel %vm267, %v256, 0
      %v287 = vsel %vm267, %v257, 0
      %v290 = vsel %vm267, %v258, 0
      %292 = vmatprep.subr.mxu0 0.0
      %293 = vmatpush1.msra.mxu0 %v227
      %294 = vmatprep.subr.mxu0 0.0
      %295 = vmatpush1.msra.mxu0 %v228
      %296 = vmatprep.subr.mxu0 0.0
      %297 = vmatpush1.msra.mxu0 %v229
      %298 = vmatprep.subr.mxu0 0.0
      %299 = vmatpush1.msra.mxu0 %v230
      %300 = vmatprep.subr.mxu0 0.0
      %301 = vmatpush1.msra.mxu0 0.0
      %302 = vmatprep.subr.mxu0 0.0
      %303 = vmatpush1.msra.mxu0 0.0
      %304 = vmatprep.subr.mxu0 0.0
      %305 = vmatpush1.msra.mxu0 0.0
      %306 = vmatprep.subr.mxu0 0.0
      %307 = vmatpush1.msra.mxu0 0.0
      %308 = vmatprep.subr.mxu0 0.0
      %309 = vmatpush1.msra.mxu0 0.0
      %310 = vmatprep.subr.mxu0 0.0
      %311 = vmatpush1.msra.mxu0 0.0
      %312 = vmatprep.subr.mxu0 0.0
      %313 = vmatpush1.msra.mxu0 0.0
      %314 = vmatprep.subr.mxu0 0.0
      %315 = vmatpush1.msra.mxu0 0.0
      %316 = vmatprep.subr.mxu0 0.0
      %317 = vmatpush1.msra.mxu0 0.0
      %318 = vmatprep.subr.mxu0 0.0
      %319 = vmatpush1.msra.mxu0 0.0
      %320 = vmatprep.subr.mxu0 0.0
      %321 = vmatpush1.msra.mxu0 0.0
      %322 = vmatprep.subr.mxu0 0.0
      %323 = vmatpush1.msra.mxu0 0.0
      %324 = vmatprep.subr.mxu0 0.0
      %325 = vmatpush1.msra.mxu0 0.0
      %326 = vmatprep.subr.mxu0 0.0
      %327 = vmatpush1.msra.mxu0 0.0
      %328 = vmatprep.subr.mxu0 0.0
      %329 = vmatpush1.msra.mxu0 0.0
      %330 = vmatprep.subr.mxu0 0.0
      %331 = vmatpush1.msra.mxu0 0.0
      %332 = vmatprep.subr.mxu0 0.0
      %333 = vmatpush1.msra.mxu0 0.0
      %334 = vmatprep.subr.mxu0 0.0
      %335 = vmatpush1.msra.mxu0 0.0
      %336 = vmatprep.subr.mxu0 0.0
      %337 = vmatpush1.msra.mxu0 0.0
      %338 = vmatprep.subr.mxu0 0.0
      %339 = vmatpush1.msra.mxu0 0.0
      %340 = vmatprep.subr.mxu0 0.0
      %341 = vmatpush1.msra.mxu0 0.0
      %342 = vmatprep.subr.mxu0 0.0
      %343 = vmatpush1.msra.mxu0 0.0
      %344 = vmatprep.subr.mxu0 0.0
      %345 = vmatpush1.msra.mxu0 0.0
      %346 = vmatprep.subr.mxu0 0.0
      %347 = vmatpush1.msra.mxu0 0.0
      %348 = vmatprep.subr.mxu0 0.0
      %349 = vmatpush1.msra.mxu0 0.0
      %350 = vmatprep.subr.mxu0 0.0
      %351 = vmatpush1.msra.mxu0 0.0
      %352 = vmatprep.subr.mxu0 0.0
      %353 = vmatpush1.msra.mxu0 0.0
      %354 = vmatprep.subr.mxu0 0.0
      %355 = vmatpush1.msra.mxu0 0.0
      %356 = vmatprep.mubr.f32.mxu0 0.0
      %357 = vmatmul.mubr.f32.gmra.mrb[0].mxu0 %v269
      %v358 = vpop.f32.mrb[0].mxu0
      %v359 = vadd.f32 0.0, %v358
      %v360 = vpop.f32.mrb[0].mxu0
      %361 = vmatprep.mubr.f32.mxu0 0.0
      %362 = vmatmul.mubr.f32.gmra.mrb[0].mxu0 %v272
      %v363 = vpop.f32.mrb[0].mxu0
      %v364 = vadd.f32 0.0, %v363
      %v365 = vpop.f32.mrb[0].mxu0
      %366 = vmatprep.mubr.f32.mxu0 0.0
      %367 = vmatmul.mubr.f32.gmra.mrb[0].mxu0 %v275
      %v368 = vpop.f32.mrb[0].mxu0
      %v369 = vadd.f32 0.0, %v368
      %v370 = vpop.f32.mrb[0].mxu0
      %371 = vmatprep.mubr.f32.mxu0 0.0
      %372 = vmatmul.mubr.f32.gmra.mrb[0].mxu0 %v278
      %v373 = vpop.f32.mrb[0].mxu0
      %v374 = vadd.f32 0.0, %v373
      %v375 = vpop.f32.mrb[0].mxu0
      %376 = vmatprep.mubr.f32.mxu0 0.0
      %377 = vmatmul.mubr.f32.gmra.mrb[0].mxu0 %v281
      %v378 = vpop.f32.mrb[0].mxu0
      %v379 = vadd.f32 0.0, %v378
      %v380 = vpop.f32.mrb[0].mxu0
      %381 = vmatprep.mubr.f32.mxu0 0.0
      %382 = vmatmul.mubr.f32.gmra.mrb[0].mxu0 %v284
      %v383 = vpop.f32.mrb[0].mxu0
      %v384 = vadd.f32 0.0, %v383
      %v385 = vpop.f32.mrb[0].mxu0
      %386 = vmatprep.mubr.f32.mxu0 0.0
      %387 = vmatmul.mubr.f32.gmra.mrb[0].mxu0 %v287
      %v388 = vpop.f32.mrb[0].mxu0
      %v389 = vadd.f32 0.0, %v388
      %v390 = vpop.f32.mrb[0].mxu0
      %391 = vmatprep.mubr.f32.mxu0 0.0
      %392 = vmatmul.mubr.f32.gmra.mrb[0].mxu0 %v290
      %v393 = vpop.f32.mrb[0].mxu0
      %v394 = vadd.f32 0.0, %v393
      %v395 = vpop.f32.mrb[0].mxu0
      %396 = vdwg.mxu0
      %v397 = vmax.f32 %v359, 0.0
      %v398 = vmax.f32 %v364, 0.0
      %v399 = vmax.f32 %v369, 0.0
      %v400 = vmax.f32 %v374, 0.0
      %v401 = vmax.f32 %v379, 0.0
      %v402 = vmax.f32 %v384, 0.0
      %v403 = vmax.f32 %v389, 0.0
      %v404 = vmax.f32 %v394, 0.0
      %v405 = vmul.f32 %v397, %v397
      %v406 = vmul.f32 %v398, %v398
      %v407 = vmul.f32 %v399, %v399
      %v408 = vmul.f32 %v400, %v400
      %v409 = vmul.f32 %v401, %v401
      %v410 = vmul.f32 %v402, %v402
      %v411 = vmul.f32 %v403, %v403
      %v412 = vmul.f32 %v404, %v404
      %v414 = vsel %vm176, %v231, 0
      %v417 = vsel %vm176, %v232, 0
      %v420 = vsel %vm176, %v233, 0
      %v423 = vsel %vm176, %v234, 0
      %425 = vmatprep.subr.mxu0 0.0
      %426 = vmatpush1.msra.mxu0 %v405
      %427 = vmatprep.subr.mxu0 0.0
      %428 = vmatpush1.msra.mxu0 %v406
      %429 = vmatprep.subr.mxu0 0.0
      %430 = vmatpush1.msra.mxu0 %v407
      %431 = vmatprep.subr.mxu0 0.0
      %432 = vmatpush1.msra.mxu0 %v408
      %433 = vmatprep.subr.mxu0 0.0
      %434 = vmatpush1.msra.mxu0 %v409
      %435 = vmatprep.subr.mxu0 0.0
      %436 = vmatpush1.msra.mxu0 %v410
      %437 = vmatprep.subr.mxu0 0.0
      %438 = vmatpush1.msra.mxu0 %v411
      %439 = vmatprep.subr.mxu0 0.0
      %440 = vmatpush1.msra.mxu0 %v412
      %441 = vmatprep.subr.mxu0 0.0
      %442 = vmatpush1.msra.mxu0 0.0
      %443 = vmatprep.subr.mxu0 0.0
      %444 = vmatpush1.msra.mxu0 0.0
      %445 = vmatprep.subr.mxu0 0.0
      %446 = vmatpush1.msra.mxu0 0.0
      %447 = vmatprep.subr.mxu0 0.0
      %448 = vmatpush1.msra.mxu0 0.0
      %449 = vmatprep.subr.mxu0 0.0
      %450 = vmatpush1.msra.mxu0 0.0
      %451 = vmatprep.subr.mxu0 0.0
      %452 = vmatpush1.msra.mxu0 0.0
      %453 = vmatprep.subr.mxu0 0.0
      %454 = vmatpush1.msra.mxu0 0.0
      %455 = vmatprep.subr.mxu0 0.0
      %456 = vmatpush1.msra.mxu0 0.0
      %457 = vmatprep.subr.mxu0 0.0
      %458 = vmatpush1.msra.mxu0 0.0
      %459 = vmatprep.subr.mxu0 0.0
      %460 = vmatpush1.msra.mxu0 0.0
      %461 = vmatprep.subr.mxu0 0.0
      %462 = vmatpush1.msra.mxu0 0.0
      %463 = vmatprep.subr.mxu0 0.0
      %464 = vmatpush1.msra.mxu0 0.0
      %465 = vmatprep.subr.mxu0 0.0
      %466 = vmatpush1.msra.mxu0 0.0
      %467 = vmatprep.subr.mxu0 0.0
      %468 = vmatpush1.msra.mxu0 0.0
      %469 = vmatprep.subr.mxu0 0.0
      %470 = vmatpush1.msra.mxu0 0.0
      %471 = vmatprep.subr.mxu0 0.0
      %472 = vmatpush1.msra.mxu0 0.0
      %473 = vmatprep.subr.mxu0 0.0
      %474 = vmatpush1.msra.mxu0 0.0
      %475 = vmatprep.subr.mxu0 0.0
      %476 = vmatpush1.msra.mxu0 0.0
      %477 = vmatprep.subr.mxu0 0.0
      %478 = vmatpush1.msra.mxu0 0.0
      %479 = vmatprep.subr.mxu0 0.0
      %480 = vmatpush1.msra.mxu0 0.0
      %481 = vmatprep.subr.mxu0 0.0
      %482 = vmatpush1.msra.mxu0 0.0
      %483 = vmatprep.subr.mxu0 0.0
      %484 = vmatpush1.msra.mxu0 0.0
      %485 = vmatprep.subr.mxu0 0.0
      %486 = vmatpush1.msra.mxu0 0.0
      %487 = vmatprep.subr.mxu0 0.0
      %488 = vmatpush1.msra.mxu0 0.0
      %489 = vmatprep.mubr.f32.mxu0 0.0
      %490 = vmatmul.mubr.f32.gmra.mrb[0].mxu0 %v414
      %v491 = vpop.f32.mrb[0].mxu0
      %v492 = vadd.f32 0.0, %v491
      %v493 = vpop.f32.mrb[0].mxu0
      %494 = vmatprep.mubr.f32.mxu0 0.0
      %495 = vmatmul.mubr.f32.gmra.mrb[0].mxu0 %v417
      %v496 = vpop.f32.mrb[0].mxu0
      %v497 = vadd.f32 0.0, %v496
      %v498 = vpop.f32.mrb[0].mxu0
      %499 = vmatprep.mubr.f32.mxu0 0.0
      %500 = vmatmul.mubr.f32.gmra.mrb[0].mxu0 %v420
      %v501 = vpop.f32.mrb[0].mxu0
      %v502 = vadd.f32 0.0, %v501
      %v503 = vpop.f32.mrb[0].mxu0
      %504 = vmatprep.mubr.f32.mxu0 0.0
      %505 = vmatmul.mubr.f32.gmra.mrb[0].mxu0 %v423
      %v506 = vpop.f32.mrb[0].mxu0
      %v507 = vadd.f32 0.0, %v506
      %v508 = vpop.f32.mrb[0].mxu0
      %509 = vdwg.mxu0
      %510 = vst.msk [vmem:[%s163] sm:$0xff] %vm176, %v492
      %511 = vst.msk [vmem:[%s163 + $0x8] sm:$0xff] %vm176, %v497
      %512 = vst.msk [vmem:[%s163 + $0x10] sm:$0xff] %vm176, %v502
      %513 = vst.msk [vmem:[%s163 + $0x18] sm:$0xff] %vm176, %v507
      %p514 = scmp.lt.s32.totalorder %s13, 1
      %s515 = scalar_select %p514, %s13, 1
      %s516 = smul.addr %s515, 4
      %s517 = smul.addr %s516, 8
      %s518 = scalar_lea.vmem %s2, %s517
      // Predicated region
      $region29: #{ppm_forward.3} parent=27 // pred_check
        %p519 = pneg %p83
      $region30: #{ppm_forward.3} parent=27 // pred_check_branch
        %521 = sbr.rel (%p519) target = $region32
      $region31: #{ppm_forward.3} parent=27 // pred_region
        _
      $region32: #{ppm_forward.3} parent=27 // pred_fallthru
        _
    $region28: #{ppm_forward.3} parent=5 // pred_fallthru
      _
    %p522 = scmp.le.s32.totalorder 2, %s8
    // Predicated region
    $region33: #{ppm_forward.3} parent=5 // pred_check
      %p523 = pneg %p522
    $region34: #{ppm_forward.3} parent=5 // pred_check_branch
      %525 = sbr.rel (%p523) target = $region36
    $region35: #{ppm_forward.3} parent=5 // pred_region
      %s526 = ssub.s32 %s8, 2
      // Predicated region
      $region37: #{ppm_forward.3} parent=35 // pred_check
        %p527 = pneg %p89
      $region38: #{ppm_forward.3} parent=35 // pred_check_branch
        %529 = sbr.rel (%p527) target = $region40
      $region39: #{ppm_forward.3} parent=35 // pred_region
        %p530 = scmp.lt.s32.totalorder %s14, 1
        %s531 = scalar_select %p530, %s14, 1
        %s532 = smul.addr %s531, 4
        %s533 = smul.addr %s532, 8
        %s534 = scalar_lea.vmem %s2, %s533
      $region40: #{ppm_forward.3} parent=35 // pred_fallthru
        _
    $region36: #{ppm_forward.3} parent=5 // pred_fallthru
      _
  $region6: #{ppm_forward.3} parent=0 // loop_footer
    %s12 = sadd.s32 1, %s8
  $region7: #{ppm_forward.3} parent=0 // loop_footer_branch
    %7 = sbr.rel target = $region3
  $region8: #{ppm_forward.3} parent=0 // loop_exit
    _

// kernel: ppm_forward.2
$region0: #{ppm_forward.2}
  #allocation0 [shape = 'u32[]', space=smem, size = 0x4, offset = 0x4, fixed_abs, tag = 'smem constant byte address 0x4 - core index']
  #allocation1 [shape = 'u32[144,128]{1,0:T(1,128)}', space=vmem, size = 0x12000, scoped, tag = 'internal scratch']
  %s0 = inlined_call_operand.vmem [shape: f32[32,128], index: 0, kind: input, shape index: {}]
  %s1 = inlined_call_operand.vmem [shape: f32[2,32,32], index: 1, kind: input, shape index: {}]
  %s2 = inlined_call_operand.vmem [shape: f32[2,32,1], index: 2, kind: input, shape index: {}]
  %s3 = inlined_call_operand.vmem [shape: f32[2,32,1], index: 3, kind: input, shape index: {}]
  %s4 = inlined_call_operand.vmem [shape: f32[32,32], index: 4, kind: input, shape index: {}]
  %s5 = inlined_call_operand.vmem [shape: f32[32,1], index: 5, kind: input, shape index: {}]
  %s6 = inlined_call_operand.vmem [shape: f32[32,128], index: 6, kind: output, shape index: {}]
  %s7 = sld [smem:[#allocation0]]
  $region34: #{ppm_forward.2} parent=0
    _
  %s9 = ssub.s32 1, %s7
  %s10 = scalar_select 0, %s9, %s7
  // Predicated region
  $region2: #{ppm_forward.2} parent=0 // pred_check
    _
  $region3: #{ppm_forward.2} parent=0 // pred_check_branch
    %12 = sbr.rel (0) target = $region5
  $region4: #{ppm_forward.2} parent=0 // pred_region
    _
  $region5: #{ppm_forward.2} parent=0 // pred_fallthru
    _
  // Predicated region
  $region6: #{ppm_forward.2} parent=0 // pred_check
    _
  $region7: #{ppm_forward.2} parent=0 // pred_check_branch
    %14 = sbr.rel (0) target = $region9
  $region8: #{ppm_forward.2} parent=0 // pred_region
    _
  $region9: #{ppm_forward.2} parent=0 // pred_fallthru
    _
  // Predicated region
  $region10: #{ppm_forward.2} parent=0 // pred_check
    _
  $region11: #{ppm_forward.2} parent=0 // pred_check_branch
    %16 = sbr.rel (0) target = $region13
  $region12: #{ppm_forward.2} parent=0 // pred_region
    _
  $region13: #{ppm_forward.2} parent=0 // pred_fallthru
    _
  // Predicated region
  $region14: #{ppm_forward.2} parent=0 // pred_check
    _
  $region15: #{ppm_forward.2} parent=0 // pred_check_branch
    %18 = sbr.rel (0) target = $region17
  $region16: #{ppm_forward.2} parent=0 // pred_region
    _
  $region17: #{ppm_forward.2} parent=0 // pred_fallthru
    _
  // Predicated region
  $region18: #{ppm_forward.2} parent=0 // pred_check
    _
  $region19: #{ppm_forward.2} parent=0 // pred_check_branch
    %20 = sbr.rel (0) target = $region21
  $region20: #{ppm_forward.2} parent=0 // pred_region
    _
  $region21: #{ppm_forward.2} parent=0 // pred_fallthru
    _
  // Predicated region
  $region22: #{ppm_forward.2} parent=0 // pred_check
    _
  $region23: #{ppm_forward.2} parent=0 // pred_check_branch
    %22 = sbr.rel (0) target = $region25
  $region24: #{ppm_forward.2} parent=0 // pred_region
    _
  $region25: #{ppm_forward.2} parent=0 // pred_fallthru
    _
  %v23 = vld [vmem:[%s0] sm:$0xff]
  %v24 = vld [vmem:[%s0 + $0x8] sm:$0xff]
  %v25 = vld [vmem:[%s0 + $0x10] sm:$0xff]
  %v26 = vld [vmem:[%s0 + $0x18] sm:$0xff]
  %v27 = vld [vmem:[%s1] sm:$0xff]
  %v28 = vld [vmem:[%s1 + $0x8] sm:$0xff]
  %v29 = vld [vmem:[%s1 + $0x10] sm:$0xff]
  %v30 = vld [vmem:[%s1 + $0x18] sm:$0xff]
  %vm31 = vcmask 261120
  %v33 = vsel %vm31, %v27, 0
  %v36 = vsel %vm31, %v28, 0
  %v39 = vsel %vm31, %v29, 0
  %v42 = vsel %vm31, %v30, 0
  %44 = vmatprep.subr.mxu0 0.0
  %45 = vmatpush1.msra.mxu0 %v23
  %46 = vmatprep.subr.mxu0 0.0
  %47 = vmatpush1.msra.mxu0 %v24
  %48 = vmatprep.subr.mxu0 0.0
  %49 = vmatpush1.msra.mxu0 %v25
  %50 = vmatprep.subr.mxu0 0.0
  %51 = vmatpush1.msra.mxu0 %v26
  %52 = vmatprep.subr.mxu0 0.0
  %53 = vmatpush1.msra.mxu0 0.0
  %54 = vmatprep.subr.mxu0 0.0
  %55 = vmatpush1.msra.mxu0 0.0
  %56 = vmatprep.subr.mxu0 0.0
  %57 = vmatpush1.msra.mxu0 0.0
  %58 = vmatprep.subr.mxu0 0.0
  %59 = vmatpush1.msra.mxu0 0.0
  %60 = vmatprep.subr.mxu0 0.0
  %61 = vmatpush1.msra.mxu0 0.0
  %62 = vmatprep.subr.mxu0 0.0
  %63 = vmatpush1.msra.mxu0 0.0
  %64 = vmatprep.subr.mxu0 0.0
  %65 = vmatpush1.msra.mxu0 0.0
  %66 = vmatprep.subr.mxu0 0.0
  %67 = vmatpush1.msra.mxu0 0.0
  %68 = vmatprep.subr.mxu0 0.0
  %69 = vmatpush1.msra.mxu0 0.0
  %70 = vmatprep.subr.mxu0 0.0
  %71 = vmatpush1.msra.mxu0 0.0
  %72 = vmatprep.subr.mxu0 0.0
  %73 = vmatpush1.msra.mxu0 0.0
  %74 = vmatprep.subr.mxu0 0.0
  %75 = vmatpush1.msra.mxu0 0.0
  %76 = vmatprep.subr.mxu0 0.0
  %77 = vmatpush1.msra.mxu0 0.0
  %78 = vmatprep.subr.mxu0 0.0
  %79 = vmatpush1.msra.mxu0 0.0
  %80 = vmatprep.subr.mxu0 0.0
  %81 = vmatpush1.msra.mxu0 0.0
  %82 = vmatprep.subr.mxu0 0.0
  %83 = vmatpush1.msra.mxu0 0.0
  %84 = vmatprep.subr.mxu0 0.0
  %85 = vmatpush1.msra.mxu0 0.0
  %86 = vmatprep.subr.mxu0 0.0
  %87 = vmatpush1.msra.mxu0 0.0
  %88 = vmatprep.subr.mxu0 0.0
  %89 = vmatpush1.msra.mxu0 0.0
  %90 = vmatprep.subr.mxu0 0.0
  %91 = vmatpush1.msra.mxu0 0.0
  %92 = vmatprep.subr.mxu0 0.0
  %93 = vmatpush1.msra.mxu0 0.0
  %94 = vmatprep.subr.mxu0 0.0
  %95 = vmatpush1.msra.mxu0 0.0
  %96 = vmatprep.subr.mxu0 0.0
  %97 = vmatpush1.msra.mxu0 0.0
  %98 = vmatprep.subr.mxu0 0.0
  %99 = vmatpush1.msra.mxu0 0.0
  %100 = vmatprep.subr.mxu0 0.0
  %101 = vmatpush1.msra.mxu0 0.0
  %102 = vmatprep.subr.mxu0 0.0
  %103 = vmatpush1.msra.mxu0 0.0
  %104 = vmatprep.subr.mxu0 0.0
  %105 = vmatpush1.msra.mxu0 0.0
  %106 = vmatprep.subr.mxu0 0.0
  %107 = vmatpush1.msra.mxu0 0.0
  %108 = vmatprep.mubr.f32.mxu0 0.0
  %109 = vmatmul.mubr.f32.gmra.mrb[0].mxu0 %v33
  %v110 = vpop.f32.mrb[0].mxu0
  %v111 = vadd.f32 0.0, %v110
  %v112 = vpop.f32.mrb[0].mxu0
  %113 = vmatprep.mubr.f32.mxu0 0.0
  %114 = vmatmul.mubr.f32.gmra.mrb[0].mxu0 %v36
  %v115 = vpop.f32.mrb[0].mxu0
  %v116 = vadd.f32 0.0, %v115
  %v117 = vpop.f32.mrb[0].mxu0
  %118 = vmatprep.mubr.f32.mxu0 0.0
  %119 = vmatmul.mubr.f32.gmra.mrb[0].mxu0 %v39
  %v120 = vpop.f32.mrb[0].mxu0
  %v121 = vadd.f32 0.0, %v120
  %v122 = vpop.f32.mrb[0].mxu0
  %123 = vmatprep.mubr.f32.mxu0 0.0
  %124 = vmatmul.mubr.f32.gmra.mrb[0].mxu0 %v42
  %v125 = vpop.f32.mrb[0].mxu0
  %v126 = vadd.f32 0.0, %v125
  %v127 = vpop.f32.mrb[0].mxu0
  %128 = vdwg.mxu0
  %129 = vadd.xlane.f32.xlu0 %v111
  %v130 = vpop.xlane.xlu0 %129
  %131 = vadd.xlane.f32.xlu0 %v116
  %v132 = vpop.xlane.xlu0 %131
  %133 = vadd.xlane.f32.xlu0 %v121
  %v134 = vpop.xlane.xlu0 %133
  %135 = vadd.xlane.f32.xlu0 %v126
  %v136 = vpop.xlane.xlu0 %135
  %v137 = vrcp.pop 128.0
  %v138 = vmul.f32 %v130, %v137
  %v139 = vmul.f32 %v132, %v137
  %v140 = vmul.f32 %v134, %v137
  %v141 = vmul.f32 %v136, %v137
  %v142 = vsub.f32 %v111, %v138
  %v143 = vsub.f32 %v116, %v139
  %v144 = vsub.f32 %v121, %v140
  %v145 = vsub.f32 %v126, %v141
  %v146 = vmul.f32 %v142, %v142
  %v147 = vmul.f32 %v143, %v143
  %v148 = vmul.f32 %v144, %v144
  %v149 = vmul.f32 %v145, %v145
  %150 = vadd.xlane.f32.xlu0 %v146
  %v151 = vpop.xlane.xlu0 %150
  %152 = vadd.xlane.f32.xlu0 %v147
  %v153 = vpop.xlane.xlu0 %152
  %154 = vadd.xlane.f32.xlu0 %v148
  %v155 = vpop.xlane.xlu0 %154
  %156 = vadd.xlane.f32.xlu0 %v149
  %v157 = vpop.xlane.xlu0 %156
  %v158 = vmul.f32 %v151, %v137
  %v159 = vmul.f32 %v153, %v137
  %v160 = vmul.f32 %v155, %v137
  %v161 = vmul.f32 %v157, %v137
  %v162 = vadd.f32 %v158, 1e-05
  %v163 = vadd.f32 %v159, 1e-05
  %v164 = vadd.f32 %v160, 1e-05
  %v165 = vadd.f32 %v161, 1e-05
  %v166 = vrsqrt.pop %v162
  %v167 = vrsqrt.pop %v163
  %v168 = vrsqrt.pop %v164
  %v169 = vrsqrt.pop %v165
  %v170 = vld [vmem:[%s2] sm:$0xff]
  %v171 = vld [vmem:[%s2 + $0x8] sm:$0xff]
  %v172 = vld [vmem:[%s2 + $0x10] sm:$0xff]
  %v173 = vld [vmem:[%s2 + $0x18] sm:$0xff]
  %v174 = vmul.f32 %v170, %v166
  %v175 = vmul.f32 %v171, %v167
  %v176 = vmul.f32 %v172, %v168
  %v177 = vmul.f32 %v173, %v169
  %v178 = vld [vmem:[%s3] sm:$0xff]
  %v179 = vld [vmem:[%s3 + $0x8] sm:$0xff]
  %v180 = vld [vmem:[%s3 + $0x10] sm:$0xff]
  %v181 = vld [vmem:[%s3 + $0x18] sm:$0xff]
  %v182 = vmul.f32 %v138, %v174
  %v183 = vmul.f32 %v139, %v175
  %v184 = vmul.f32 %v140, %v176
  %v185 = vmul.f32 %v141, %v177
  %v186 = vsub.f32 %v178, %v182
  %v187 = vsub.f32 %v179, %v183
  %v188 = vsub.f32 %v180, %v184
  %v189 = vsub.f32 %v181, %v185
  %191 = vset.pattern.permute.xlu0 0
  %192 = vperm.xlu0 %191, %v174
  %v193 = vpop.permute.xlu0 %192
  %196 = vset.pattern.permute.xlu0 0
  %197 = vperm.xlu0 %196, %v175
  %v198 = vpop.permute.xlu0 %197
  %201 = vset.pattern.permute.xlu0 0
  %202 = vperm.xlu0 %201, %v176
  %v203 = vpop.permute.xlu0 %202
  %206 = vset.pattern.permute.xlu0 0
  %207 = vperm.xlu0 %206, %v177
  %v208 = vpop.permute.xlu0 %207
  %v210 = vmul.f32 %v111, %v193
  %v211 = vmul.f32 %v116, %v198
  %v212 = vmul.f32 %v121, %v203
  %v213 = vmul.f32 %v126, %v208
  %215 = vset.pattern.permute.xlu0 0
  %216 = vperm.xlu0 %215, %v186
  %v217 = vpop.permute.xlu0 %216
  %220 = vset.pattern.permute.xlu0 0
  %221 = vperm.xlu0 %220, %v187
  %v222 = vpop.permute.xlu0 %221
  %225 = vset.pattern.permute.xlu0 0
  %226 = vperm.xlu0 %225, %v188
  %v227 = vpop.permute.xlu0 %226
  %230 = vset.pattern.permute.xlu0 0
  %231 = vperm.xlu0 %230, %v189
  %v232 = vpop.permute.xlu0 %231
  %v234 = vadd.f32 %v210, %v217
  %v235 = vadd.f32 %v211, %v222
  %v236 = vadd.f32 %v212, %v227
  %v237 = vadd.f32 %v213, %v232
  %v238 = vmax.f32 %v234, 0.0
  %v239 = vmax.f32 %v235, 0.0
  %v240 = vmax.f32 %v236, 0.0
  %v241 = vmax.f32 %v237, 0.0
  %s242 = scalar_lea.vmem %s1, 32
  %v243 = vld [vmem:[%s242] sm:$0xff]
  %v244 = vld [vmem:[%s242 + $0x8] sm:$0xff]
  %v245 = vld [vmem:[%s242 + $0x10] sm:$0xff]
  %v246 = vld [vmem:[%s242 + $0x18] sm:$0xff]
  %v248 = vsel %vm31, %v243, 0
  %v251 = vsel %vm31, %v244, 0
  %v254 = vsel %vm31, %v245, 0
  %v257 = vsel %vm31, %v246, 0
  %259 = vmatprep.subr.mxu0 0.0
  %260 = vmatpush1.msra.mxu0 %v238
  %261 = vmatprep.subr.mxu0 0.0
  %262 = vmatpush1.msra.mxu0 %v239
  %263 = vmatprep.subr.mxu0 0.0
  %264 = vmatpush1.msra.mxu0 %v240
  %265 = vmatprep.subr.mxu0 0.0
  %266 = vmatpush1.msra.mxu0 %v241
  %267 = vmatprep.subr.mxu0 0.0
  %268 = vmatpush1.msra.mxu0 0.0
  %269 = vmatprep.subr.mxu0 0.0
  %270 = vmatpush1.msra.mxu0 0.0
  %271 = vmatprep.subr.mxu0 0.0
  %272 = vmatpush1.msra.mxu0 0.0
  %273 = vmatprep.subr.mxu0 0.0
  %274 = vmatpush1.msra.mxu0 0.0
  %275 = vmatprep.subr.mxu0 0.0
  %276 = vmatpush1.msra.mxu0 0.0
  %277 = vmatprep.subr.mxu0 0.0
  %278 = vmatpush1.msra.mxu0 0.0
  %279 = vmatprep.subr.mxu0 0.0
  %280 = vmatpush1.msra.mxu0 0.0
  %281 = vmatprep.subr.mxu0 0.0
  %282 = vmatpush1.msra.mxu0 0.0
  %283 = vmatprep.subr.mxu0 0.0
  %284 = vmatpush1.msra.mxu0 0.0
  %285 = vmatprep.subr.mxu0 0.0
  %286 = vmatpush1.msra.mxu0 0.0
  %287 = vmatprep.subr.mxu0 0.0
  %288 = vmatpush1.msra.mxu0 0.0
  %289 = vmatprep.subr.mxu0 0.0
  %290 = vmatpush1.msra.mxu0 0.0
  %291 = vmatprep.subr.mxu0 0.0
  %292 = vmatpush1.msra.mxu0 0.0
  %293 = vmatprep.subr.mxu0 0.0
  %294 = vmatpush1.msra.mxu0 0.0
  %295 = vmatprep.subr.mxu0 0.0
  %296 = vmatpush1.msra.mxu0 0.0
  %297 = vmatprep.subr.mxu0 0.0
  %298 = vmatpush1.msra.mxu0 0.0
  %299 = vmatprep.subr.mxu0 0.0
  %300 = vmatpush1.msra.mxu0 0.0
  %301 = vmatprep.subr.mxu0 0.0
  %302 = vmatpush1.msra.mxu0 0.0
  %303 = vmatprep.subr.mxu0 0.0
  %304 = vmatpush1.msra.mxu0 0.0
  %305 = vmatprep.subr.mxu0 0.0
  %306 = vmatpush1.msra.mxu0 0.0
  %307 = vmatprep.subr.mxu0 0.0
  %308 = vmatpush1.msra.mxu0 0.0
  %309 = vmatprep.subr.mxu0 0.0
  %310 = vmatpush1.msra.mxu0 0.0
  %311 = vmatprep.subr.mxu0 0.0
  %312 = vmatpush1.msra.mxu0 0.0
  %313 = vmatprep.subr.mxu0 0.0
  %314 = vmatpush1.msra.mxu0 0.0
  %315 = vmatprep.subr.mxu0 0.0
  %316 = vmatpush1.msra.mxu0 0.0
  %317 = vmatprep.subr.mxu0 0.0
  %318 = vmatpush1.msra.mxu0 0.0
  %319 = vmatprep.subr.mxu0 0.0
  %320 = vmatpush1.msra.mxu0 0.0
  %321 = vmatprep.subr.mxu0 0.0
  %322 = vmatpush1.msra.mxu0 0.0
  %323 = vmatprep.mubr.f32.mxu0 0.0
  %324 = vmatmul.mubr.f32.gmra.mrb[0].mxu0 %v248
  %v325 = vpop.f32.mrb[0].mxu0
  %v326 = vadd.f32 0.0, %v325
  %v327 = vpop.f32.mrb[0].mxu0
  %328 = vmatprep.mubr.f32.mxu0 0.0
  %329 = vmatmul.mubr.f32.gmra.mrb[0].mxu0 %v251
  %v330 = vpop.f32.mrb[0].mxu0
  %v331 = vadd.f32 0.0, %v330
  %v332 = vpop.f32.mrb[0].mxu0
  %333 = vmatprep.mubr.f32.mxu0 0.0
  %334 = vmatmul.mubr.f32.gmra.mrb[0].mxu0 %v254
  %v335 = vpop.f32.mrb[0].mxu0
  %v336 = vadd.f32 0.0, %v335
  %v337 = vpop.f32.mrb[0].mxu0
  %338 = vmatprep.mubr.f32.mxu0 0.0
  %339 = vmatmul.mubr.f32.gmra.mrb[0].mxu0 %v257
  %v340 = vpop.f32.mrb[0].mxu0
  %v341 = vadd.f32 0.0, %v340
  %v342 = vpop.f32.mrb[0].mxu0
  %343 = vdwg.mxu0
  %344 = vadd.xlane.f32.xlu0 %v326
  %v345 = vpop.xlane.xlu0 %344
  %346 = vadd.xlane.f32.xlu0 %v331
  %v347 = vpop.xlane.xlu0 %346
  %348 = vadd.xlane.f32.xlu0 %v336
  %v349 = vpop.xlane.xlu0 %348
  %350 = vadd.xlane.f32.xlu0 %v341
  %v351 = vpop.xlane.xlu0 %350
  %v352 = vmul.f32 %v345, %v137
  %v353 = vmul.f32 %v347, %v137
  %v354 = vmul.f32 %v349, %v137
  %v355 = vmul.f32 %v351, %v137
  %v356 = vsub.f32 %v326, %v352
  %v357 = vsub.f32 %v331, %v353
  %v358 = vsub.f32 %v336, %v354
  %v359 = vsub.f32 %v341, %v355
  %v360 = vmul.f32 %v356, %v356
  %v361 = vmul.f32 %v357, %v357
  %v362 = vmul.f32 %v358, %v358
  %v363 = vmul.f32 %v359, %v359
  %364 = vadd.xlane.f32.xlu0 %v360
  %v365 = vpop.xlane.xlu0 %364
  %366 = vadd.xlane.f32.xlu0 %v361
  %v367 = vpop.xlane.xlu0 %366
  %368 = vadd.xlane.f32.xlu0 %v362
  %v369 = vpop.xlane.xlu0 %368
  %370 = vadd.xlane.f32.xlu0 %v363
  %v371 = vpop.xlane.xlu0 %370
  %v372 = vmul.f32 %v365, %v137
  %v373 = vmul.f32 %v367, %v137
  %v374 = vmul.f32 %v369, %v137
  %v375 = vmul.f32 %v371, %v137
  %v376 = vadd.f32 %v372, 1e-05
  %v377 = vadd.f32 %v373, 1e-05
  %v378 = vadd.f32 %v374, 1e-05
  %v379 = vadd.f32 %v375, 1e-05
  %v380 = vrsqrt.pop %v376
  %v381 = vrsqrt.pop %v377
  %v382 = vrsqrt.pop %v378
  %v383 = vrsqrt.pop %v379
  %s384 = scalar_lea.vmem %s2, 32
  %v385 = vld [vmem:[%s384] sm:$0xff]
  %v386 = vld [vmem:[%s384 + $0x8] sm:$0xff]
  %v387 = vld [vmem:[%s384 + $0x10] sm:$0xff]
  %v388 = vld [vmem:[%s384 + $0x18] sm:$0xff]
  %v389 = vmul.f32 %v385, %v380
  %v390 = vmul.f32 %v386, %v381
  %v391 = vmul.f32 %v387, %v382
  %v392 = vmul.f32 %v388, %v383
  %s393 = scalar_lea.vmem %s3, 32
  %v394 = vld [vmem:[%s393] sm:$0xff]
  %v395 = vld [vmem:[%s393 + $0x8] sm:$0xff]
  %v396 = vld [vmem:[%s393 + $0x10] sm:$0xff]
  %v397 = vld [vmem:[%s393 + $0x18] sm:$0xff]
  %v398 = vmul.f32 %v352, %v389
  %v399 = vmul.f32 %v353, %v390
  %v400 = vmul.f32 %v354, %v391
  %v401 = vmul.f32 %v355, %v392
  %v402 = vsub.f32 %v394, %v398
  %v403 = vsub.f32 %v395, %v399
  %v404 = vsub.f32 %v396, %v400
  %v405 = vsub.f32 %v397, %v401
  %407 = vset.pattern.permute.xlu0 0
  %408 = vperm.xlu0 %407, %v389
  %v409 = vpop.permute.xlu0 %408
  %412 = vset.pattern.permute.xlu0 0
  %413 = vperm.xlu0 %412, %v390
  %v414 = vpop.permute.xlu0 %413
  %417 = vset.pattern.permute.xlu0 0
  %418 = vperm.xlu0 %417, %v391
  %v419 = vpop.permute.xlu0 %418
  %422 = vset.pattern.permute.xlu0 0
  %423 = vperm.xlu0 %422, %v392
  %v424 = vpop.permute.xlu0 %423
  %v426 = vmul.f32 %v326, %v409
  %v427 = vmul.f32 %v331, %v414
  %v428 = vmul.f32 %v336, %v419
  %v429 = vmul.f32 %v341, %v424
  %431 = vset.pattern.permute.xlu0 0
  %432 = vperm.xlu0 %431, %v402
  %v433 = vpop.permute.xlu0 %432
  %436 = vset.pattern.permute.xlu0 0
  %437 = vperm.xlu0 %436, %v403
  %v438 = vpop.permute.xlu0 %437
  %441 = vset.pattern.permute.xlu0 0
  %442 = vperm.xlu0 %441, %v404
  %v443 = vpop.permute.xlu0 %442
  %446 = vset.pattern.permute.xlu0 0
  %447 = vperm.xlu0 %446, %v405
  %v448 = vpop.permute.xlu0 %447
  %v450 = vadd.f32 %v426, %v433
  %v451 = vadd.f32 %v427, %v438
  %v452 = vadd.f32 %v428, %v443
  %v453 = vadd.f32 %v429, %v448
  %v454 = vmax.f32 %v450, 0.0
  %v455 = vmax.f32 %v451, 0.0
  %v456 = vmax.f32 %v452, 0.0
  %v457 = vmax.f32 %v453, 0.0
  %v458 = vld [vmem:[%s4] sm:$0xff]
  %v459 = vld [vmem:[%s4 + $0x8] sm:$0xff]
  %v460 = vld [vmem:[%s4 + $0x10] sm:$0xff]
  %v461 = vld [vmem:[%s4 + $0x18] sm:$0xff]
  %v462 = vld [vmem:[%s5] sm:$0xff]
  %v463 = vld [vmem:[%s5 + $0x8] sm:$0xff]
  %v464 = vld [vmem:[%s5 + $0x10] sm:$0xff]
  %v465 = vld [vmem:[%s5 + $0x18] sm:$0xff]
  %467 = vset.pattern.permute.xlu0 0
  %468 = vperm.xlu0 %467, %v462
  %v469 = vpop.permute.xlu0 %468
  %472 = vset.pattern.permute.xlu0 0
  %473 = vperm.xlu0 %472, %v463
  %v474 = vpop.permute.xlu0 %473
  %477 = vset.pattern.permute.xlu0 0
  %478 = vperm.xlu0 %477, %v464
  %v479 = vpop.permute.xlu0 %478
  %482 = vset.pattern.permute.xlu0 0
  %483 = vperm.xlu0 %482, %v465
  %v484 = vpop.permute.xlu0 %483
  %v487 = vsel %vm31, %v458, 0
  %v490 = vsel %vm31, %v459, 0
  %v493 = vsel %vm31, %v460, 0
  %v496 = vsel %vm31, %v461, 0
  %498 = vmatprep.subr.mxu0 0.0
  %499 = vmatpush1.msra.mxu0 %v454
  %500 = vmatprep.subr.mxu0 0.0
  %501 = vmatpush1.msra.mxu0 %v455
  %502 = vmatprep.subr.mxu0 0.0
  %503 = vmatpush1.msra.mxu0 %v456
  %504 = vmatprep.subr.mxu0 0.0
  %505 = vmatpush1.msra.mxu0 %v457
  %506 = vmatprep.subr.mxu0 0.0
  %507 = vmatpush1.msra.mxu0 0.0
  %508 = vmatprep.subr.mxu0 0.0
  %509 = vmatpush1.msra.mxu0 0.0
  %510 = vmatprep.subr.mxu0 0.0
  %511 = vmatpush1.msra.mxu0 0.0
  %512 = vmatprep.subr.mxu0 0.0
  %513 = vmatpush1.msra.mxu0 0.0
  %514 = vmatprep.subr.mxu0 0.0
  %515 = vmatpush1.msra.mxu0 0.0
  %516 = vmatprep.subr.mxu0 0.0
  %517 = vmatpush1.msra.mxu0 0.0
  %518 = vmatprep.subr.mxu0 0.0
  %519 = vmatpush1.msra.mxu0 0.0
  %520 = vmatprep.subr.mxu0 0.0
  %521 = vmatpush1.msra.mxu0 0.0
  %522 = vmatprep.subr.mxu0 0.0
  %523 = vmatpush1.msra.mxu0 0.0
  %524 = vmatprep.subr.mxu0 0.0
  %525 = vmatpush1.msra.mxu0 0.0
  %526 = vmatprep.subr.mxu0 0.0
  %527 = vmatpush1.msra.mxu0 0.0
  %528 = vmatprep.subr.mxu0 0.0
  %529 = vmatpush1.msra.mxu0 0.0
  %530 = vmatprep.subr.mxu0 0.0
  %531 = vmatpush1.msra.mxu0 0.0
  %532 = vmatprep.subr.mxu0 0.0
  %533 = vmatpush1.msra.mxu0 0.0
  %534 = vmatprep.subr.mxu0 0.0
  %535 = vmatpush1.msra.mxu0 0.0
  %536 = vmatprep.subr.mxu0 0.0
  %537 = vmatpush1.msra.mxu0 0.0
  %538 = vmatprep.subr.mxu0 0.0
  %539 = vmatpush1.msra.mxu0 0.0
  %540 = vmatprep.subr.mxu0 0.0
  %541 = vmatpush1.msra.mxu0 0.0
  %542 = vmatprep.subr.mxu0 0.0
  %543 = vmatpush1.msra.mxu0 0.0
  %544 = vmatprep.subr.mxu0 0.0
  %545 = vmatpush1.msra.mxu0 0.0
  %546 = vmatprep.subr.mxu0 0.0
  %547 = vmatpush1.msra.mxu0 0.0
  %548 = vmatprep.subr.mxu0 0.0
  %549 = vmatpush1.msra.mxu0 0.0
  %550 = vmatprep.subr.mxu0 0.0
  %551 = vmatpush1.msra.mxu0 0.0
  %552 = vmatprep.subr.mxu0 0.0
  %553 = vmatpush1.msra.mxu0 0.0
  %554 = vmatprep.subr.mxu0 0.0
  %555 = vmatpush1.msra.mxu0 0.0
  %556 = vmatprep.subr.mxu0 0.0
  %557 = vmatpush1.msra.mxu0 0.0
  %558 = vmatprep.subr.mxu0 0.0
  %559 = vmatpush1.msra.mxu0 0.0
  %560 = vmatprep.subr.mxu0 0.0
  %561 = vmatpush1.msra.mxu0 0.0
  %562 = vmatprep.mubr.f32.mxu0 0.0
  %563 = vmatmul.mubr.f32.gmra.mrb[0].mxu0 %v487
  %v564 = vpop.f32.mrb[0].mxu0
  %v565 = vadd.f32 %v469, %v564
  %v566 = vpop.f32.mrb[0].mxu0
  %567 = vmatprep.mubr.f32.mxu0 0.0
  %568 = vmatmul.mubr.f32.gmra.mrb[0].mxu0 %v490
  %v569 = vpop.f32.mrb[0].mxu0
  %v570 = vadd.f32 %v474, %v569
  %v571 = vpop.f32.mrb[0].mxu0
  %572 = vmatprep.mubr.f32.mxu0 0.0
  %573 = vmatmul.mubr.f32.gmra.mrb[0].mxu0 %v493
  %v574 = vpop.f32.mrb[0].mxu0
  %v575 = vadd.f32 %v479, %v574
  %v576 = vpop.f32.mrb[0].mxu0
  %577 = vmatprep.mubr.f32.mxu0 0.0
  %578 = vmatmul.mubr.f32.gmra.mrb[0].mxu0 %v496
  %v579 = vpop.f32.mrb[0].mxu0
  %v580 = vadd.f32 %v484, %v579
  %v581 = vpop.f32.mrb[0].mxu0
  %582 = vdwg.mxu0
  %583 = vst [vmem:[%s6] sm:$0xff] %v565
  %584 = vst [vmem:[%s6 + $0x8] sm:$0xff] %v570
  %585 = vst [vmem:[%s6 + $0x10] sm:$0xff] %v575
  %586 = vst [vmem:[%s6 + $0x18] sm:$0xff] %v580
  // Predicated region
  $region26: #{ppm_forward.2} parent=0 // pred_check
    _
  $region27: #{ppm_forward.2} parent=0 // pred_check_branch
    %588 = sbr.rel (0) target = $region29
  $region28: #{ppm_forward.2} parent=0 // pred_region
    _
  $region29: #{ppm_forward.2} parent=0 // pred_fallthru
    _
  // Predicated region
  $region30: #{ppm_forward.2} parent=0 // pred_check
    _
  $region31: #{ppm_forward.2} parent=0 // pred_check_branch
    %590 = sbr.rel (0) target = $region33
  $region32: #{ppm_forward.2} parent=0 // pred_region
    _
  $region33: #{ppm_forward.2} parent=0 // pred_fallthru
    _

</llo_original>
